<compile_context>
chip_gen: v7x
topology: tpu7x:2x2x1
jax: 0.10.0
libtpu: 0.0.40
codegen_flags: <defaults>
</compile_context>

<pallas_src>
import functools

import jax
import jax.numpy as jnp
from jax.experimental import pallas as pl
from jax.experimental.pallas import tpu as pltpu


def _round_up(x, m):
    return -(-x // m) * m


def _vmem_capacity_bytes():
    """Physical VMEM per TensorCore; conservative (v7x) fallback."""
    try:
        info = pltpu.get_tpu_info()
        cap = int(getattr(info, "vmem_capacity_bytes", 0) or 0)
        if cap > 0:
            return cap
    except Exception:
        pass
    return 64 * 1024 * 1024


def _qual_attn_kernel(x_ref, w1_ref, b1_ref, w2_ref, out_ref, *, s_valid, mxu_dtype):
    # x_ref:  (TB, S_pad, E)  tile of TB batch elements
    # w1_ref: (E, A)          first linear weight, stored as (in, out) = W1.T
    # b1_ref: (1, A)          first linear bias (f32)
    # w2_ref: (1, A)          second linear weight (no bias), stored as a row (f32)
    # out_ref:(TB, E)         context vectors for this batch tile
    tb, s, e = x_ref.shape
    a = w1_ref.shape[1]

    xb = x_ref[...]                                             # (TB, S, E)

    # ---- scoring MLP: tanh(x @ W1 + b1) . w2 -----------------------------
    # One 2-D MXU matmul over the flattened token slab; bf16 operands with
    # f32 accumulation keep the A-wide matmul off the critical MXU slot.
    xf = xb.reshape(tb * s, e).astype(mxu_dtype)                # (TB*S, E)
    h = jnp.tanh(
        jnp.dot(xf, w1_ref[...].astype(mxu_dtype),
                preferred_element_type=jnp.float32)
        + b1_ref[...]
    )                                                           # (TB*S, A) f32
    # Contract A; keep scores LANE-dense as (TB, S).
    scores = jnp.sum(h.reshape(tb, s, a) * w2_ref[...], axis=-1)   # (TB, S)

    if s_valid < s:
        # Zero-padded sequence rows must not participate in the softmax.
        pos = jax.lax.broadcasted_iota(jnp.int32, (tb, s), 1)
        scores = jnp.where(pos < s_valid, scores, jnp.float32(-1e30))

    # ---- unnormalized softmax over the sequence (last) axis --------------
    m = jnp.max(scores, axis=-1, keepdims=True)                 # (TB, 1)
    p = jnp.exp(scores - m)                                     # (TB, S), <= 1
    l = jnp.sum(p, axis=-1, keepdims=True)                      # (TB, 1)

    # ---- context: batched MXU matmul, normalize on the small (TB,E) ------
    p_mm = p.astype(xb.dtype) if xb.dtype == jnp.bfloat16 else p
    ctx = jnp.einsum("tqs,tse->tqe", p_mm[:, None, :], xb,
                     preferred_element_type=jnp.float32)        # (TB, 1, E)
    inv_l = pl.reciprocal(l, approx=True)                       # EUP slot
    out_ref[...] = (ctx.reshape(tb, e) * inv_l).astype(out_ref.dtype)


def qualitative_attention(x, w1, b1, w2, *, mxu_dtype=jnp.bfloat16, min_grid_steps=4):
    """x: (B, S, E); w1: (E, A); b1: (A,); w2: (A,). Returns (B, E)."""
    B, S, E = x.shape
    A = w1.shape[1]
    itemsize = jnp.dtype(x.dtype).itemsize
    sub = 8 if itemsize >= 4 else 16          # sublane packing of x / out dtype

    # --- pad S so the in-kernel reshape is layout-clean (no hidden copy). --
    s_pad = _round_up(S, sub)

    # --- corrected per-batch-row VMEM footprint (lane/sublane padded). -----
    vmem_cap = _vmem_capacity_bytes()
    vmem_budget = vmem_cap // 2               # per-step footprint target
    lane_e = _round_up(E, 128)
    lane_s = _round_up(s_pad, 128)
    mxu_itemsize = jnp.dtype(mxu_dtype).itemsize
    per_row = (2 * s_pad * E * itemsize            # x tile, double-buffered
               + s_pad * E * mxu_itemsize          # bf16 copy of x for the MXU
               + s_pad * 128 * 4                   # h, lane-padded to 128, f32
               + 3 * lane_s * 4                    # scores / p / p_mm rows
               + 8 * lane_e * 4                    # (TB,1,E) ctx, sublane-padded
               + 2 * E * itemsize)                 # out tile, double-buffered
    fixed = 2 * (E * A + 2 * A) * 4 + (1 << 20)    # weights (dbl-buffered) + slack

    tb_max = max(1, (vmem_budget - fixed) // per_row)
    tb_max = max(sub, (tb_max // sub) * sub)       # sublane aligned, >= one group
    # TODO(synk): if even tb_max == sub overflows VMEM (huge S*E), tile S too.

    b_ceil = _round_up(B, sub)
    tb_max = min(tb_max, b_ceil)

    # --- pick the grid-step count: pipeline depth + 2-TC sharding. ---------
    steps = -(-b_ceil // tb_max)
    if b_ceil // sub >= min_grid_steps:            # enough rows to split cheaply
        steps = max(steps, min_grid_steps)         # keep the DMA pipeline busy
    if steps > 1 and steps % 2:                    # even -> both v7x TCs used
        steps += 1
    tb = min(tb_max, _round_up(-(-b_ceil // steps), sub))
    b_pad = tb * steps

    x_in = x
    if (b_pad != B) or (s_pad != S):
        # Zero-padded batch rows give a finite uniform softmax and are sliced
        # off; zero-padded sequence rows are masked inside the kernel.
        x_in = jnp.pad(x, ((0, b_pad - B), (0, s_pad - S), (0, 0)))

    b1_2d = b1.reshape(1, A).astype(jnp.float32)
    w2_2d = w2.reshape(1, A).astype(jnp.float32)

    # --- VMEM limit: never below the corrected estimate, <= 3/4 of physical.
    est = int(tb * per_row + fixed)
    vmem_limit = int(min(max(est + est // 2, 32 * 1024 * 1024), (vmem_cap * 3) // 4))
    vmem_limit = max(vmem_limit, est)

    cost = pl.CostEstimate(
        flops=2 * b_pad * s_pad * E * A + 2 * b_pad * s_pad * A + 2 * b_pad * s_pad * E,
        transcendentals=b_pad * s_pad * (A + 1) + b_pad,
        bytes_accessed=itemsize * (b_pad * s_pad * E + b_pad * E) + 4 * (E * A + 2 * A),
    )

    kernel = functools.partial(_qual_attn_kernel, s_valid=S, mxu_dtype=mxu_dtype)

    out = pl.pallas_call(
        kernel,
        out_shape=jax.ShapeDtypeStruct((b_pad, E), x.dtype),
        grid_spec=pltpu.PrefetchScalarGridSpec(
            num_scalar_prefetch=0,
            grid=(steps,),
            in_specs=[
                pl.BlockSpec((tb, s_pad, E), lambda b: (b, 0, 0)),
                pl.BlockSpec((E, A), lambda b: (0, 0)),
                pl.BlockSpec((1, A), lambda b: (0, 0)),
                pl.BlockSpec((1, A), lambda b: (0, 0)),
            ],
            out_specs=pl.BlockSpec((tb, E), lambda b: (b, 0)),
        ),
        compiler_params=pltpu.CompilerParams(
            dimension_semantics=("parallel",),
            vmem_limit_bytes=vmem_limit,
        ),
        cost_estimate=cost,
    )(x_in, w1, b1_2d, w2_2d)
    return out[:B]


def qualitative_attention_ref(x, w1, b1, w2):
    """Pure-JAX reference matching the PyTorch forward (full f32)."""
    scores = jnp.tanh(jnp.einsum("bse,ea->bsa", x, w1) + b1)     # (B, S, A)
    scores = jnp.einsum("bsa,a->bs", scores, w2)                 # (B, S)
    attn = jax.nn.softmax(scores, axis=1)                        # (B, S)
    return jnp.einsum("bs,bse->be", attn, x)                     # (B, E)


if __name__ == "__main__":
    B, S, E, A = 2, 8, 32, 16

    key = jax.random.PRNGKey(0)
    kx, kw1, kb1, kw2 = jax.random.split(key, 4)

    x = jax.random.normal(kx, (B, S, E), dtype=jnp.float32)
    # Parameter shapes from nn.Linear(E, A) and nn.Linear(A, 1, bias=False);
    # w1 stored as (in, out) = W1.T.
    w1 = jax.random.normal(kw1, (E, A), dtype=jnp.float32) * 0.1
    b1 = jax.random.normal(kb1, (A,), dtype=jnp.float32) * 0.1
    w2 = jax.random.normal(kw2, (A,), dtype=jnp.float32) * 0.1

    out = qualitative_attention(x, w1, b1, w2)
    out = jax.block_until_ready(out)

    ref = qualitative_attention_ref(x, w1, b1, w2)
    assert out.shape == (B, E)
    # Tolerance loosened vs 1e-5: scoring matmul runs with bf16 MXU operands
    # (f32 accumulation) and the softmax denominator uses the EUP approximate
    # reciprocal.
    assert jnp.allclose(out, ref, atol=5e-3, rtol=5e-3), "mismatch vs reference"

    print("KERNEL_OK")
</pallas_src>

<mosaic_0001>
module attributes {stable_mosaic.version = 11 : i64} {
  func.func @_qual_attn_kernel(%arg0: i32, %arg1: memref<8x8x32xf32, #tpu.memory_space<vmem>>, %arg2: memref<32x16xf32, #tpu.memory_space<vmem>>, %arg3: memref<1x16xf32, #tpu.memory_space<vmem>>, %arg4: memref<1x16xf32, #tpu.memory_space<vmem>>, %arg5: memref<8x32xf32, #tpu.memory_space<vmem>>) attributes {dimension_semantics = [#tpu.dimension_semantics<parallel>], iteration_bounds = array<i64: 1>, scalar_prefetch = 0 : i64, scratch_operands = 0 : i64, tpu.core_type = #tpu.core_type<tc>, window_params = [{transform_indices = @transform_0, window_bounds = array<i64: 8, 8, 32>}, {pipeline_mode = #tpu.pipeline_mode<synchronous>, transform_indices = @transform_1, window_bounds = array<i64: 32, 16>}, {pipeline_mode = #tpu.pipeline_mode<synchronous>, transform_indices = @transform_2, window_bounds = array<i64: 1, 16>}, {pipeline_mode = #tpu.pipeline_mode<synchronous>, transform_indices = @transform_3, window_bounds = array<i64: 1, 16>}, {transform_indices = @transform_4, window_bounds = array<i64: 8, 32>}]} {
    %c0 = arith.constant 0 : index
    %c0_0 = arith.constant 0 : index
    %c0_1 = arith.constant 0 : index
    %0 = vector.load %arg1[%c0, %c0_0, %c0_1] : memref<8x8x32xf32, #tpu.memory_space<vmem>>, vector<8x8x32xf32>
    %1 = vector.shape_cast %0 : vector<8x8x32xf32> to vector<64x32xf32>
    %2 = arith.truncf %1 : vector<64x32xf32> to vector<64x32xbf16>
    %c0_2 = arith.constant 0 : index
    %c0_3 = arith.constant 0 : index
    %3 = vector.load %arg2[%c0_2, %c0_3] : memref<32x16xf32, #tpu.memory_space<vmem>>, vector<32x16xf32>
    %4 = arith.truncf %3 : vector<32x16xf32> to vector<32x16xbf16>
    %cst = arith.constant dense<0.000000e+00> : vector<64x16xf32>
    %5 = tpu.matmul %2, %4, %cst {dimension_numbers = #tpu.dot_dimension_numbers<[1], [0], [0], [1], [0, 0, 1, 1], [], []>} : vector<64x32xbf16>, vector<32x16xbf16>, vector<64x16xf32> -> vector<64x16xf32>
    %c0_4 = arith.constant 0 : index
    %c0_5 = arith.constant 0 : index
    %6 = vector.load %arg3[%c0_4, %c0_5] : memref<1x16xf32, #tpu.memory_space<vmem>>, vector<1x16xf32>
    %7 = vector.broadcast %6 : vector<1x16xf32> to vector<64x16xf32>
    %8 = arith.addf %5, %7 : vector<64x16xf32>
    %9 = math.tanh %8 : vector<64x16xf32>
    %10 = vector.shape_cast %9 : vector<64x16xf32> to vector<8x8x16xf32>
    %c0_6 = arith.constant 0 : index
    %c0_7 = arith.constant 0 : index
    %11 = vector.load %arg4[%c0_6, %c0_7] : memref<1x16xf32, #tpu.memory_space<vmem>>, vector<1x16xf32>
    %12 = vector.shape_cast %11 : vector<1x16xf32> to vector<1x1x16xf32>
    %13 = vector.broadcast %12 : vector<1x1x16xf32> to vector<8x8x16xf32>
    %14 = arith.mulf %10, %13 : vector<8x8x16xf32>
    %cst_8 = arith.constant dense<0.000000e+00> : vector<8x8xf32>
    %15 = vector.multi_reduction <add>, %14, %cst_8 [2] : vector<8x8x16xf32> to vector<8x8xf32>
    %cst_9 = arith.constant dense<0xFF800000> : vector<8xf32>
    %16 = vector.multi_reduction <maximumf>, %15, %cst_9 [1] : vector<8x8xf32> to vector<8xf32>
    %17 = vector.shape_cast %16 : vector<8xf32> to vector<8x1xf32>
    %18 = vector.broadcast %17 : vector<8x1xf32> to vector<8x8xf32>
    %19 = arith.subf %15, %18 : vector<8x8xf32>
    %20 = math.exp %19 : vector<8x8xf32>
    %cst_10 = arith.constant dense<0.000000e+00> : vector<8xf32>
    %21 = vector.multi_reduction <add>, %20, %cst_10 [1] : vector<8x8xf32> to vector<8xf32>
    %22 = vector.shape_cast %21 : vector<8xf32> to vector<8x1xf32>
    %23 = vector.shape_cast %20 : vector<8x8xf32> to vector<8x1x8xf32>
    "tpu.trace_start"() <{level = 10 : i32, message = "tqs,tse->tqe"}> : () -> ()
    %cst_11 = arith.constant dense<0.000000e+00> : vector<8x1x32xf32>
    %24 = tpu.matmul %23, %0, %cst_11 {dimension_numbers = #tpu.dot_dimension_numbers<[2], [1], [1], [2], [0, 0, 0, 1, 1, 2], [0], [0]>} : vector<8x1x8xf32>, vector<8x8x32xf32>, vector<8x1x32xf32> -> vector<8x1x32xf32>
    "tpu.trace_stop"() : () -> ()
    %25 = tpu.reciprocal %22 {approx = true} : vector<8x1xf32> -> vector<8x1xf32>
    %26 = vector.shape_cast %24 : vector<8x1x32xf32> to vector<8x32xf32>
    %27 = vector.broadcast %25 : vector<8x1xf32> to vector<8x32xf32>
    %28 = arith.mulf %26, %27 : vector<8x32xf32>
    %c0_12 = arith.constant 0 : index
    %c0_13 = arith.constant 0 : index
    %29 = vector.load %arg5[%c0_12, %c0_13] : memref<8x32xf32, #tpu.memory_space<vmem>>, vector<8x32xf32>
    tpu.vector_store %arg5[%c0_12, %c0_13], %28 {strides = array<i32>} : memref<8x32xf32, #tpu.memory_space<vmem>>, vector<8x32xf32>,
    return
  }
  func.func @transform_0(%arg0: i32) -> (i32, i32, i32) {
    %c0_i32 = arith.constant 0 : i32
    %c0_i32_0 = arith.constant 0 : i32
    %c0_i32_1 = arith.constant 0 : i32
    return %arg0, %c0_i32, %c0_i32_0 : i32, i32, i32
  }
  func.func @transform_1(%arg0: i32) -> (i32, i32) {
    %c0_i32 = arith.constant 0 : i32
    %c0_i32_0 = arith.constant 0 : i32
    %c0_i32_1 = arith.constant 0 : i32
    return %c0_i32, %c0_i32_0 : i32, i32
  }
  func.func @transform_2(%arg0: i32) -> (i32, i32) {
    %c0_i32 = arith.constant 0 : i32
    %c0_i32_0 = arith.constant 0 : i32
    %c0_i32_1 = arith.constant 0 : i32
    return %c0_i32, %c0_i32_0 : i32, i32
  }
  func.func @transform_3(%arg0: i32) -> (i32, i32) {
    %c0_i32 = arith.constant 0 : i32
    %c0_i32_0 = arith.constant 0 : i32
    %c0_i32_1 = arith.constant 0 : i32
    return %c0_i32, %c0_i32_0 : i32, i32
  }
  func.func @transform_4(%arg0: i32) -> (i32, i32) {
    %c0_i32 = arith.constant 0 : i32
    %c0_i32_0 = arith.constant 0 : i32
    return %arg0, %c0_i32 : i32, i32
  }
}

</mosaic_0001>

<llo_original>
// kernel: tpu_custom_call.1
$region0: #{tpu_custom_call.1}
  #allocation0 [shape = 'u32[]', space=smem, size = 0x4, offset = 0x4, fixed_abs, tag = 'smem constant byte address 0x4 - core index']
  #allocation1 [shape = 'u32[144,128]{1,0:T(1,128)}', space=vmem, size = 0x12000, scoped, tag = 'internal scratch']
  %s0 = inlined_call_operand.hbm [shape: f32[8,8,32], index: 0, kind: input, shape index: {}]
  %s1 = inlined_call_operand.vmem [shape: f32[32,16], index: 1, kind: input, shape index: {}]
  %s2 = inlined_call_operand.vmem [shape: f32[1,16], index: 2, kind: input, shape index: {}]
  %s3 = inlined_call_operand.vmem [shape: f32[1,16], index: 3, kind: input, shape index: {}]
  %s4 = inlined_call_operand.hbm [shape: f32[8,32], index: 4, kind: output, shape index: {}]
  %s5 = sld [smem:[#allocation0]]
  $region30: #{tpu_custom_call.1} parent=0
    _
  %s7 = ssub.s32 1, %s5
  %s8 = scalar_select 0, %s7, %s5
  $region1: #{tpu_custom_call.1} parent=0
    #allocation2 [shape = 'u8[32768]{0}', space=vmem, size = 0x8000, scoped, tag = 'input window, operand 0, single buffered']
    #allocation3 [shape = 's32[1]{0}', space=sflag, size = 0x4, scoped, tag = 'scoped memory for tpu_custom_call.1']
    #allocation4 [shape = 's32[1]{0}', space=sflag, size = 0x4, scoped, tag = 'scoped memory for tpu_custom_call.1']
    #allocation5 [shape = 'u8[4096]{0}', space=vmem, size = 0x1000, scoped, tag = 'output window, operand 0, single buffered']
    %9 = vsyncpa [#allocation3], 0
    %10 = vsyncpa [#allocation4], 0
    // Predicated region
    $region2: #{tpu_custom_call.1} parent=1 // pred_check
      _
    $region3: #{tpu_custom_call.1} parent=1 // pred_check_branch
      %12 = sbr.rel (0) target = $region5
    $region4: #{tpu_custom_call.1} parent=1 // pred_region
      %s14 = ssub.s32 1024, 1024
      %15 = vsyncadd [#allocation3], %s14
      %s16 = sshll.u32 [#allocation2], 4
      %s17 = int_to_ptr.vmem [resolvable:$true] %s16
      %22 = dma.hbm_to_vmem [thread:$0]  %s0, 1024, %s17, [#allocation3], 128, 128, 8
    $region5: #{tpu_custom_call.1} parent=1 // pred_fallthru
      _
    // Predicated region
    $region6: #{tpu_custom_call.1} parent=1 // pred_check
      _
    $region7: #{tpu_custom_call.1} parent=1 // pred_check_branch
      %24 = sbr.rel (0) target = $region9
    $region8: #{tpu_custom_call.1} parent=1 // pred_region
      _
    $region9: #{tpu_custom_call.1} parent=1 // pred_fallthru
      _
    // Predicated region
    $region10: #{tpu_custom_call.1} parent=1 // pred_check
      _
    $region11: #{tpu_custom_call.1} parent=1 // pred_check_branch
      %26 = sbr.rel (0) target = $region13
    $region12: #{tpu_custom_call.1} parent=1 // pred_region
      _
    $region13: #{tpu_custom_call.1} parent=1 // pred_fallthru
      _
    // Predicated region
    $region14: #{tpu_custom_call.1} parent=1 // pred_check
      _
    $region15: #{tpu_custom_call.1} parent=1 // pred_check_branch
      %28 = sbr.rel (0) target = $region17
    $region16: #{tpu_custom_call.1} parent=1 // pred_region
      _
    $region17: #{tpu_custom_call.1} parent=1 // pred_fallthru
      _
    // Predicated region
    $region18: #{tpu_custom_call.1} parent=1 // pred_check
      _
    $region19: #{tpu_custom_call.1} parent=1 // pred_check_branch
      %30 = sbr.rel (0) target = $region21
    $region20: #{tpu_custom_call.1} parent=1 // pred_region
      %31 = dma.done [#allocation3], 1024
    $region21: #{tpu_custom_call.1} parent=1 // pred_fallthru
      _
    %v33 = vld [vmem:[#allocation2] sm:$0xff]
    %v34 = vld [vmem:[#allocation2 + $0x8] sm:$0xff]
    %v35 = vld [vmem:[#allocation2 + $0x10] sm:$0xff]
    %v36 = vld [vmem:[#allocation2 + $0x18] sm:$0xff]
    %v37 = vld [vmem:[#allocation2 + $0x20] sm:$0xff]
    %v38 = vld [vmem:[#allocation2 + $0x28] sm:$0xff]
    %v39 = vld [vmem:[#allocation2 + $0x30] sm:$0xff]
    %v40 = vld [vmem:[#allocation2 + $0x38] sm:$0xff]
    %v41 = vpack.c.bf16 %v34, %v33
    %v42 = vpack.c.bf16 %v36, %v35
    %v43 = vpack.c.bf16 %v38, %v37
    %v44 = vpack.c.bf16 %v40, %v39
    %v45 = vld [vmem:[%s1] sm:$0xff]
    %v46 = vld [vmem:[%s1 + $0x8] sm:$0xff]
    %v47 = vld [vmem:[%s1 + $0x10] sm:$0xff]
    %v48 = vld [vmem:[%s1 + $0x18] sm:$0xff]
    %v49 = vpack.c.bf16 %v46, %v45
    %v50 = vpack.c.bf16 %v48, %v47
    %v51 = vld [vmem:[%s2] sm:$0x1]
    %v53 = vlaneseq
    %v54 = vshrl.u32 %v53, 7
    %v55 = vsub.s32 0, %v54
    %v56 = vrot.slane %v51, %v55
    %vm58 = vcmask 261120
    %v60 = vsel %vm58, %v41, 0
    %v63 = vsel %vm58, %v42, 0
    %v66 = vsel %vm58, %v43, 0
    %v69 = vsel %vm58, %v44, 0
    %71 = vmatprep.subr.bf16.mxu0 0
    %72 = vmatpush1.bf16.msra.mxu0 %v49
    %73 = vmatprep.subr.bf16.mxu0 0
    %74 = vmatpush1.bf16.msra.mxu0 %v50
    %75 = vmatprep.subr.bf16.mxu0 0
    %76 = vmatpush1.bf16.msra.mxu0 0
    %77 = vmatprep.subr.bf16.mxu0 0
    %78 = vmatpush1.bf16.msra.mxu0 0
    %79 = vmatprep.subr.bf16.mxu0 0
    %80 = vmatpush1.bf16.msra.mxu0 0
    %81 = vmatprep.subr.bf16.mxu0 0
    %82 = vmatpush1.bf16.msra.mxu0 0
    %83 = vmatprep.subr.bf16.mxu0 0
    %84 = vmatpush1.bf16.msra.mxu0 0
    %85 = vmatprep.subr.bf16.mxu0 0
    %86 = vmatpush1.bf16.msra.mxu0 0
    %87 = vmatprep.subr.bf16.mxu0 0
    %88 = vmatpush1.bf16.msra.mxu0 0
    %89 = vmatprep.subr.bf16.mxu0 0
    %90 = vmatpush1.bf16.msra.mxu0 0
    %91 = vmatprep.subr.bf16.mxu0 0
    %92 = vmatpush1.bf16.msra.mxu0 0
    %93 = vmatprep.subr.bf16.mxu0 0
    %94 = vmatpush1.bf16.msra.mxu0 0
    %95 = vmatprep.subr.bf16.mxu0 0
    %96 = vmatpush1.bf16.msra.mxu0 0
    %97 = vmatprep.subr.bf16.mxu0 0
    %98 = vmatpush1.bf16.msra.mxu0 0
    %99 = vmatprep.subr.bf16.mxu0 0
    %100 = vmatpush1.bf16.msra.mxu0 0
    %101 = vmatprep.subr.bf16.mxu0 0
    %102 = vmatpush1.bf16.msra.mxu0 0
    %103 = vmatprep.mubr.bf16.mxu0 0
    %104 = vmatmul.mubr.bf16.gmra.mrb[0].mxu0 %v60
    %v105 = vpop.f32.mrb[0].mxu0
    %v106 = vadd.f32 %v56, %v105
    %v107 = vpop.f32.mrb[0].mxu0
    %v108 = vpop.f32.mrb[0].mxu0
    %v109 = vadd.f32 %v56, %v108
    %v110 = vpop.f32.mrb[0].mxu0
    %111 = vmatprep.mubr.bf16.mxu0 0
    %112 = vmatmul.mubr.bf16.gmra.mrb[0].mxu0 %v63
    %v113 = vpop.f32.mrb[0].mxu0
    %v114 = vadd.f32 %v56, %v113
    %v115 = vpop.f32.mrb[0].mxu0
    %v116 = vpop.f32.mrb[0].mxu0
    %v117 = vadd.f32 %v56, %v116
    %v118 = vpop.f32.mrb[0].mxu0
    %119 = vmatprep.mubr.bf16.mxu0 0
    %120 = vmatmul.mubr.bf16.gmra.mrb[0].mxu0 %v66
    %v121 = vpop.f32.mrb[0].mxu0
    %v122 = vadd.f32 %v56, %v121
    %v123 = vpop.f32.mrb[0].mxu0
    %v124 = vpop.f32.mrb[0].mxu0
    %v125 = vadd.f32 %v56, %v124
    %v126 = vpop.f32.mrb[0].mxu0
    %127 = vmatprep.mubr.bf16.mxu0 0
    %128 = vmatmul.mubr.bf16.gmra.mrb[0].mxu0 %v69
    %v129 = vpop.f32.mrb[0].mxu0
    %v130 = vadd.f32 %v56, %v129
    %v131 = vpop.f32.mrb[0].mxu0
    %v132 = vpop.f32.mrb[0].mxu0
    %v133 = vadd.f32 %v56, %v132
    %v134 = vpop.f32.mrb[0].mxu0
    %135 = vdwg.mxu0
    %v136 = vtanh.pop %v106
    %v137 = vtanh.pop %v109
    %v138 = vtanh.pop %v114
    %v139 = vtanh.pop %v117
    %v140 = vtanh.pop %v122
    %v141 = vtanh.pop %v125
    %v142 = vtanh.pop %v130
    %v143 = vtanh.pop %v133
    %v144 = vld [vmem:[%s3] sm:$0x1]
    %v146 = vlaneseq
    %v147 = vshrl.u32 %v146, 7
    %v148 = vsub.s32 0, %v147
    %v149 = vrot.slane %v144, %v148
    %v151 = vmul.f32 %v136, %v149
    %v152 = vmul.f32 %v137, %v149
    %v153 = vmul.f32 %v138, %v149
    %v154 = vmul.f32 %v139, %v149
    %v155 = vmul.f32 %v140, %v149
    %v156 = vmul.f32 %v141, %v149
    %v157 = vmul.f32 %v142, %v149
    %v158 = vmul.f32 %v143, %v149
    %vm159 = vcmask 130048
    %v160 = vsel %vm159, %v151, 0.0
    %161 = vadd.xlane.f32.xlu0 %v160
    %v162 = vpop.xlane.xlu0 %161
    %v163 = vsel %vm159, %v152, 0.0
    %164 = vadd.xlane.f32.xlu0 %v163
    %v165 = vpop.xlane.xlu0 %164
    %v166 = vsel %vm159, %v153, 0.0
    %167 = vadd.xlane.f32.xlu0 %v166
    %v168 = vpop.xlane.xlu0 %167
    %v169 = vsel %vm159, %v154, 0.0
    %170 = vadd.xlane.f32.xlu0 %v169
    %v171 = vpop.xlane.xlu0 %170
    %v172 = vsel %vm159, %v155, 0.0
    %173 = vadd.xlane.f32.xlu0 %v172
    %v174 = vpop.xlane.xlu0 %173
    %v175 = vsel %vm159, %v156, 0.0
    %176 = vadd.xlane.f32.xlu0 %v175
    %v177 = vpop.xlane.xlu0 %176
    %v178 = vsel %vm159, %v157, 0.0
    %179 = vadd.xlane.f32.xlu0 %v178
    %v180 = vpop.xlane.xlu0 %179
    %v181 = vsel %vm159, %v158, 0.0
    %182 = vadd.xlane.f32.xlu0 %v181
    %v183 = vpop.xlane.xlu0 %182
    %v192 = vlaneseq
    %v193 = vand.u32 %v192, 127
    %v194 = vlaneseq
    %v195 = vshrl.u32 %v194, 7
    %v196 = vsub.s32 %v193, %v195
    %v197 = vrot.slane %v162, %v196
    %v198 = vlaneseq
    %v199 = vshrl.u32 %v198, 7
    %v200 = vsub.s32 %v193, %v199
    %v201 = vrot.slane %v165, %v200
    %v202 = vlaneseq
    %v203 = vshrl.u32 %v202, 7
    %v204 = vsub.s32 %v193, %v203
    %v205 = vrot.slane %v168, %v204
    %v206 = vlaneseq
    %v207 = vshrl.u32 %v206, 7
    %v208 = vsub.s32 %v193, %v207
    %v209 = vrot.slane %v171, %v208
    %v210 = vlaneseq
    %v211 = vshrl.u32 %v210, 7
    %v212 = vsub.s32 %v193, %v211
    %v213 = vrot.slane %v174, %v212
    %v214 = vlaneseq
    %v215 = vshrl.u32 %v214, 7
    %v216 = vsub.s32 %v193, %v215
    %v217 = vrot.slane %v177, %v216
    %v218 = vlaneseq
    %v219 = vshrl.u32 %v218, 7
    %v220 = vsub.s32 %v193, %v219
    %v221 = vrot.slane %v180, %v220
    %v222 = vlaneseq
    %v223 = vshrl.u32 %v222, 7
    %v224 = vsub.s32 %v193, %v223
    %v225 = vrot.slane %v183, %v224
    %vm226 = vcmask 1041409
    %v227 = vsel %vm226, %v201, %v197
    %vm228 = vcmask 1042434
    %v229 = vsel %vm228, %v205, %v227
    %vm230 = vcmask 1043459
    %v231 = vsel %vm230, %v209, %v229
    %vm232 = vcmask 1044484
    %v233 = vsel %vm232, %v213, %v231
    %vm234 = vcmask 1045509
    %v235 = vsel %vm234, %v217, %v233
    %vm236 = vcmask 1046534
    %v237 = vsel %vm236, %v221, %v235
    %vm238 = vcmask 1047559
    %v239 = vsel %vm238, %v225, %v237
    %vm241 = vcmask 64512
    %v242 = vsel %vm241, %v239, -inf
    %243 = vmax.xlane.f32.xlu0 %v242
    %v244 = vpop.xlane.xlu0 %243
    %v246 = vlaneseq
    %v247 = vshrl.u32 %v246, 7
    %v248 = vsub.s32 0, %v247
    %v249 = vrot.slane %v244, %v248
    %v250 = vlaneseq
    %v251 = vshrl.u32 %v250, 7
    %v252 = vsub.s32 1, %v251
    %v253 = vrot.slane %v244, %v252
    %v254 = vlaneseq
    %v255 = vshrl.u32 %v254, 7
    %v256 = vsub.s32 2, %v255
    %v257 = vrot.slane %v244, %v256
    %v258 = vlaneseq
    %v259 = vshrl.u32 %v258, 7
    %v260 = vsub.s32 3, %v259
    %v261 = vrot.slane %v244, %v260
    %v262 = vlaneseq
    %v263 = vshrl.u32 %v262, 7
    %v264 = vsub.s32 4, %v263
    %v265 = vrot.slane %v244, %v264
    %v266 = vlaneseq
    %v267 = vshrl.u32 %v266, 7
    %v268 = vsub.s32 5, %v267
    %v269 = vrot.slane %v244, %v268
    %v270 = vlaneseq
    %v271 = vshrl.u32 %v270, 7
    %v272 = vsub.s32 6, %v271
    %v273 = vrot.slane %v244, %v272
    %v274 = vlaneseq
    %v275 = vshrl.u32 %v274, 7
    %v276 = vsub.s32 7, %v275
    %v277 = vrot.slane %v244, %v276
    %v286 = vsub.f32 %v162, %v249
    %v287 = vsub.f32 %v165, %v253
    %v288 = vsub.f32 %v168, %v257
    %v289 = vsub.f32 %v171, %v261
    %v290 = vsub.f32 %v174, %v265
    %v291 = vsub.f32 %v177, %v269
    %v292 = vsub.f32 %v180, %v273
    %v293 = vsub.f32 %v183, %v277
    %v294 = vmul.f32 %v286, 1.442695
    %v295 = vpow.pop %v294
    %v296 = vmul.f32 %v287, 1.442695
    %v297 = vpow.pop %v296
    %v298 = vmul.f32 %v288, 1.442695
    %v299 = vpow.pop %v298
    %v300 = vmul.f32 %v289, 1.442695
    %v301 = vpow.pop %v300
    %v302 = vmul.f32 %v290, 1.442695
    %v303 = vpow.pop %v302
    %v304 = vmul.f32 %v291, 1.442695
    %v305 = vpow.pop %v304
    %v306 = vmul.f32 %v292, 1.442695
    %v307 = vpow.pop %v306
    %v308 = vmul.f32 %v293, 1.442695
    %v309 = vpow.pop %v308
    %318 = vset.pattern.permute.xlu0 0
    %319 = vperm.xlu0 %318, %v295
    %v320 = vpop.permute.xlu0 %319
    %321 = vset.pattern.permute.xlu0 0
    %322 = vperm.xlu0 %321, %v297
    %v323 = vpop.permute.xlu0 %322
    %324 = vset.pattern.permute.xlu0 0
    %325 = vperm.xlu0 %324, %v299
    %v326 = vpop.permute.xlu0 %325
    %327 = vset.pattern.permute.xlu0 0
    %328 = vperm.xlu0 %327, %v301
    %v329 = vpop.permute.xlu0 %328
    %330 = vset.pattern.permute.xlu0 0
    %331 = vperm.xlu0 %330, %v303
    %v332 = vpop.permute.xlu0 %331
    %333 = vset.pattern.permute.xlu0 0
    %334 = vperm.xlu0 %333, %v305
    %v335 = vpop.permute.xlu0 %334
    %336 = vset.pattern.permute.xlu0 0
    %337 = vperm.xlu0 %336, %v307
    %v338 = vpop.permute.xlu0 %337
    %339 = vset.pattern.permute.xlu0 0
    %340 = vperm.xlu0 %339, %v309
    %v341 = vpop.permute.xlu0 %340
    %v342 = vlaneseq
    %v343 = vshrl.u32 %v342, 7
    %v344 = vsub.s32 %v193, %v343
    %v345 = vrot.slane %v320, %v344
    %v346 = vlaneseq
    %v347 = vshrl.u32 %v346, 7
    %v348 = vsub.s32 %v193, %v347
    %v349 = vrot.slane %v323, %v348
    %v350 = vlaneseq
    %v351 = vshrl.u32 %v350, 7
    %v352 = vsub.s32 %v193, %v351
    %v353 = vrot.slane %v326, %v352
    %v354 = vlaneseq
    %v355 = vshrl.u32 %v354, 7
    %v356 = vsub.s32 %v193, %v355
    %v357 = vrot.slane %v329, %v356
    %v358 = vlaneseq
    %v359 = vshrl.u32 %v358, 7
    %v360 = vsub.s32 %v193, %v359
    %v361 = vrot.slane %v332, %v360
    %v362 = vlaneseq
    %v363 = vshrl.u32 %v362, 7
    %v364 = vsub.s32 %v193, %v363
    %v365 = vrot.slane %v335, %v364
    %v366 = vlaneseq
    %v367 = vshrl.u32 %v366, 7
    %v368 = vsub.s32 %v193, %v367
    %v369 = vrot.slane %v338, %v368
    %v370 = vlaneseq
    %v371 = vshrl.u32 %v370, 7
    %v372 = vsub.s32 %v193, %v371
    %v373 = vrot.slane %v341, %v372
    %v374 = vsel %vm226, %v349, %v345
    %v375 = vsel %vm228, %v353, %v374
    %v376 = vsel %vm230, %v357, %v375
    %v377 = vsel %vm232, %v361, %v376
    %v378 = vsel %vm234, %v365, %v377
    %v379 = vsel %vm236, %v369, %v378
    %v380 = vsel %vm238, %v373, %v379
    %v382 = vsel %vm241, %v380, 0.0
    %383 = vadd.xlane.f32.xlu0 %v382
    %v384 = vpop.xlane.xlu0 %383
    %v385 = vsel %vm241, %v345, 0
    %387 = vmatprep.subr.mxu0 0.0
    %388 = vmatpush1.msra.mxu0 %v33
    %389 = vmatprep.subr.mxu0 0.0
    %390 = vmatpush1.msra.mxu0 0.0
    %391 = vmatprep.subr.mxu0 0.0
    %392 = vmatpush1.msra.mxu0 0.0
    %393 = vmatprep.subr.mxu0 0.0
    %394 = vmatpush1.msra.mxu0 0.0
    %395 = vmatprep.subr.mxu0 0.0
    %396 = vmatpush1.msra.mxu0 0.0
    %397 = vmatprep.subr.mxu0 0.0
    %398 = vmatpush1.msra.mxu0 0.0
    %399 = vmatprep.subr.mxu0 0.0
    %400 = vmatpush1.msra.mxu0 0.0
    %401 = vmatprep.subr.mxu0 0.0
    %402 = vmatpush1.msra.mxu0 0.0
    %403 = vmatprep.subr.mxu0 0.0
    %404 = vmatpush1.msra.mxu0 0.0
    %405 = vmatprep.subr.mxu0 0.0
    %406 = vmatpush1.msra.mxu0 0.0
    %407 = vmatprep.subr.mxu0 0.0
    %408 = vmatpush1.msra.mxu0 0.0
    %409 = vmatprep.subr.mxu0 0.0
    %410 = vmatpush1.msra.mxu0 0.0
    %411 = vmatprep.subr.mxu0 0.0
    %412 = vmatpush1.msra.mxu0 0.0
    %413 = vmatprep.subr.mxu0 0.0
    %414 = vmatpush1.msra.mxu0 0.0
    %415 = vmatprep.subr.mxu0 0.0
    %416 = vmatpush1.msra.mxu0 0.0
    %417 = vmatprep.subr.mxu0 0.0
    %418 = vmatpush1.msra.mxu0 0.0
    %419 = vmatprep.subr.mxu0 0.0
    %420 = vmatpush1.msra.mxu0 0.0
    %421 = vmatprep.subr.mxu0 0.0
    %422 = vmatpush1.msra.mxu0 0.0
    %423 = vmatprep.subr.mxu0 0.0
    %424 = vmatpush1.msra.mxu0 0.0
    %425 = vmatprep.subr.mxu0 0.0
    %426 = vmatpush1.msra.mxu0 0.0
    %427 = vmatprep.subr.mxu0 0.0
    %428 = vmatpush1.msra.mxu0 0.0
    %429 = vmatprep.subr.mxu0 0.0
    %430 = vmatpush1.msra.mxu0 0.0
    %431 = vmatprep.subr.mxu0 0.0
    %432 = vmatpush1.msra.mxu0 0.0
    %433 = vmatprep.subr.mxu0 0.0
    %434 = vmatpush1.msra.mxu0 0.0
    %435 = vmatprep.subr.mxu0 0.0
    %436 = vmatpush1.msra.mxu0 0.0
    %437 = vmatprep.subr.mxu0 0.0
    %438 = vmatpush1.msra.mxu0 0.0
    %439 = vmatprep.subr.mxu0 0.0
    %440 = vmatpush1.msra.mxu0 0.0
    %441 = vmatprep.subr.mxu0 0.0
    %442 = vmatpush1.msra.mxu0 0.0
    %443 = vmatprep.subr.mxu0 0.0
    %444 = vmatpush1.msra.mxu0 0.0
    %445 = vmatprep.subr.mxu0 0.0
    %446 = vmatpush1.msra.mxu0 0.0
    %447 = vmatprep.subr.mxu0 0.0
    %448 = vmatpush1.msra.mxu0 0.0
    %449 = vmatprep.subr.mxu0 0.0
    %450 = vmatpush1.msra.mxu0 0.0
    %451 = vmatprep.mubr.f32.mxu0 0.0
    %452 = vmatmul.mubr.f32.gmra.mrb[0].mxu0 %v385
    %v453 = vpop.f32.mrb[0].mxu0
    %v454 = vadd.f32 0.0, %v453
    %v455 = vpop.f32.mrb[0].mxu0
    %456 = vdwg.mxu0
    %v457 = vsel %vm241, %v349, 0
    %459 = vmatprep.subr.mxu0 0.0
    %460 = vmatpush1.msra.mxu0 %v34
    %461 = vmatprep.subr.mxu0 0.0
    %462 = vmatpush1.msra.mxu0 0.0
    %463 = vmatprep.subr.mxu0 0.0
    %464 = vmatpush1.msra.mxu0 0.0
    %465 = vmatprep.subr.mxu0 0.0
    %466 = vmatpush1.msra.mxu0 0.0
    %467 = vmatprep.subr.mxu0 0.0
    %468 = vmatpush1.msra.mxu0 0.0
    %469 = vmatprep.subr.mxu0 0.0
    %470 = vmatpush1.msra.mxu0 0.0
    %471 = vmatprep.subr.mxu0 0.0
    %472 = vmatpush1.msra.mxu0 0.0
    %473 = vmatprep.subr.mxu0 0.0
    %474 = vmatpush1.msra.mxu0 0.0
    %475 = vmatprep.subr.mxu0 0.0
    %476 = vmatpush1.msra.mxu0 0.0
    %477 = vmatprep.subr.mxu0 0.0
    %478 = vmatpush1.msra.mxu0 0.0
    %479 = vmatprep.subr.mxu0 0.0
    %480 = vmatpush1.msra.mxu0 0.0
    %481 = vmatprep.subr.mxu0 0.0
    %482 = vmatpush1.msra.mxu0 0.0
    %483 = vmatprep.subr.mxu0 0.0
    %484 = vmatpush1.msra.mxu0 0.0
    %485 = vmatprep.subr.mxu0 0.0
    %486 = vmatpush1.msra.mxu0 0.0
    %487 = vmatprep.subr.mxu0 0.0
    %488 = vmatpush1.msra.mxu0 0.0
    %489 = vmatprep.subr.mxu0 0.0
    %490 = vmatpush1.msra.mxu0 0.0
    %491 = vmatprep.subr.mxu0 0.0
    %492 = vmatpush1.msra.mxu0 0.0
    %493 = vmatprep.subr.mxu0 0.0
    %494 = vmatpush1.msra.mxu0 0.0
    %495 = vmatprep.subr.mxu0 0.0
    %496 = vmatpush1.msra.mxu0 0.0
    %497 = vmatprep.subr.mxu0 0.0
    %498 = vmatpush1.msra.mxu0 0.0
    %499 = vmatprep.subr.mxu0 0.0
    %500 = vmatpush1.msra.mxu0 0.0
    %501 = vmatprep.subr.mxu0 0.0
    %502 = vmatpush1.msra.mxu0 0.0
    %503 = vmatprep.subr.mxu0 0.0
    %504 = vmatpush1.msra.mxu0 0.0
    %505 = vmatprep.subr.mxu0 0.0
    %506 = vmatpush1.msra.mxu0 0.0
    %507 = vmatprep.subr.mxu0 0.0
    %508 = vmatpush1.msra.mxu0 0.0
    %509 = vmatprep.subr.mxu0 0.0
    %510 = vmatpush1.msra.mxu0 0.0
    %511 = vmatprep.subr.mxu0 0.0
    %512 = vmatpush1.msra.mxu0 0.0
    %513 = vmatprep.subr.mxu0 0.0
    %514 = vmatpush1.msra.mxu0 0.0
    %515 = vmatprep.subr.mxu0 0.0
    %516 = vmatpush1.msra.mxu0 0.0
    %517 = vmatprep.subr.mxu0 0.0
    %518 = vmatpush1.msra.mxu0 0.0
    %519 = vmatprep.subr.mxu0 0.0
    %520 = vmatpush1.msra.mxu0 0.0
    %521 = vmatprep.subr.mxu0 0.0
    %522 = vmatpush1.msra.mxu0 0.0
    %523 = vmatprep.mubr.f32.mxu0 0.0
    %524 = vmatmul.mubr.f32.gmra.mrb[0].mxu0 %v457
    %v525 = vpop.f32.mrb[0].mxu0
    %v526 = vadd.f32 0.0, %v525
    %v527 = vpop.f32.mrb[0].mxu0
    %528 = vdwg.mxu0
    %v529 = vsel %vm241, %v353, 0
    %531 = vmatprep.subr.mxu0 0.0
    %532 = vmatpush1.msra.mxu0 %v35
    %533 = vmatprep.subr.mxu0 0.0
    %534 = vmatpush1.msra.mxu0 0.0
    %535 = vmatprep.subr.mxu0 0.0
    %536 = vmatpush1.msra.mxu0 0.0
    %537 = vmatprep.subr.mxu0 0.0
    %538 = vmatpush1.msra.mxu0 0.0
    %539 = vmatprep.subr.mxu0 0.0
    %540 = vmatpush1.msra.mxu0 0.0
    %541 = vmatprep.subr.mxu0 0.0
    %542 = vmatpush1.msra.mxu0 0.0
    %543 = vmatprep.subr.mxu0 0.0
    %544 = vmatpush1.msra.mxu0 0.0
    %545 = vmatprep.subr.mxu0 0.0
    %546 = vmatpush1.msra.mxu0 0.0
    %547 = vmatprep.subr.mxu0 0.0
    %548 = vmatpush1.msra.mxu0 0.0
    %549 = vmatprep.subr.mxu0 0.0
    %550 = vmatpush1.msra.mxu0 0.0
    %551 = vmatprep.subr.mxu0 0.0
    %552 = vmatpush1.msra.mxu0 0.0
    %553 = vmatprep.subr.mxu0 0.0
    %554 = vmatpush1.msra.mxu0 0.0
    %555 = vmatprep.subr.mxu0 0.0
    %556 = vmatpush1.msra.mxu0 0.0
    %557 = vmatprep.subr.mxu0 0.0
    %558 = vmatpush1.msra.mxu0 0.0
    %559 = vmatprep.subr.mxu0 0.0
    %560 = vmatpush1.msra.mxu0 0.0
    %561 = vmatprep.subr.mxu0 0.0
    %562 = vmatpush1.msra.mxu0 0.0
    %563 = vmatprep.subr.mxu0 0.0
    %564 = vmatpush1.msra.mxu0 0.0
    %565 = vmatprep.subr.mxu0 0.0
    %566 = vmatpush1.msra.mxu0 0.0
    %567 = vmatprep.subr.mxu0 0.0
    %568 = vmatpush1.msra.mxu0 0.0
    %569 = vmatprep.subr.mxu0 0.0
    %570 = vmatpush1.msra.mxu0 0.0
    %571 = vmatprep.subr.mxu0 0.0
    %572 = vmatpush1.msra.mxu0 0.0
    %573 = vmatprep.subr.mxu0 0.0
    %574 = vmatpush1.msra.mxu0 0.0
    %575 = vmatprep.subr.mxu0 0.0
    %576 = vmatpush1.msra.mxu0 0.0
    %577 = vmatprep.subr.mxu0 0.0
    %578 = vmatpush1.msra.mxu0 0.0
    %579 = vmatprep.subr.mxu0 0.0
    %580 = vmatpush1.msra.mxu0 0.0
    %581 = vmatprep.subr.mxu0 0.0
    %582 = vmatpush1.msra.mxu0 0.0
    %583 = vmatprep.subr.mxu0 0.0
    %584 = vmatpush1.msra.mxu0 0.0
    %585 = vmatprep.subr.mxu0 0.0
    %586 = vmatpush1.msra.mxu0 0.0
    %587 = vmatprep.subr.mxu0 0.0
    %588 = vmatpush1.msra.mxu0 0.0
    %589 = vmatprep.subr.mxu0 0.0
    %590 = vmatpush1.msra.mxu0 0.0
    %591 = vmatprep.subr.mxu0 0.0
    %592 = vmatpush1.msra.mxu0 0.0
    %593 = vmatprep.subr.mxu0 0.0
    %594 = vmatpush1.msra.mxu0 0.0
    %595 = vmatprep.mubr.f32.mxu0 0.0
    %596 = vmatmul.mubr.f32.gmra.mrb[0].mxu0 %v529
    %v597 = vpop.f32.mrb[0].mxu0
    %v598 = vadd.f32 0.0, %v597
    %v599 = vpop.f32.mrb[0].mxu0
    %600 = vdwg.mxu0
    %v601 = vsel %vm241, %v357, 0
    %603 = vmatprep.subr.mxu0 0.0
    %604 = vmatpush1.msra.mxu0 %v36
    %605 = vmatprep.subr.mxu0 0.0
    %606 = vmatpush1.msra.mxu0 0.0
    %607 = vmatprep.subr.mxu0 0.0
    %608 = vmatpush1.msra.mxu0 0.0
    %609 = vmatprep.subr.mxu0 0.0
    %610 = vmatpush1.msra.mxu0 0.0
    %611 = vmatprep.subr.mxu0 0.0
    %612 = vmatpush1.msra.mxu0 0.0
    %613 = vmatprep.subr.mxu0 0.0
    %614 = vmatpush1.msra.mxu0 0.0
    %615 = vmatprep.subr.mxu0 0.0
    %616 = vmatpush1.msra.mxu0 0.0
    %617 = vmatprep.subr.mxu0 0.0
    %618 = vmatpush1.msra.mxu0 0.0
    %619 = vmatprep.subr.mxu0 0.0
    %620 = vmatpush1.msra.mxu0 0.0
    %621 = vmatprep.subr.mxu0 0.0
    %622 = vmatpush1.msra.mxu0 0.0
    %623 = vmatprep.subr.mxu0 0.0
    %624 = vmatpush1.msra.mxu0 0.0
    %625 = vmatprep.subr.mxu0 0.0
    %626 = vmatpush1.msra.mxu0 0.0
    %627 = vmatprep.subr.mxu0 0.0
    %628 = vmatpush1.msra.mxu0 0.0
    %629 = vmatprep.subr.mxu0 0.0
    %630 = vmatpush1.msra.mxu0 0.0
    %631 = vmatprep.subr.mxu0 0.0
    %632 = vmatpush1.msra.mxu0 0.0
    %633 = vmatprep.subr.mxu0 0.0
    %634 = vmatpush1.msra.mxu0 0.0
    %635 = vmatprep.subr.mxu0 0.0
    %636 = vmatpush1.msra.mxu0 0.0
    %637 = vmatprep.subr.mxu0 0.0
    %638 = vmatpush1.msra.mxu0 0.0
    %639 = vmatprep.subr.mxu0 0.0
    %640 = vmatpush1.msra.mxu0 0.0
    %641 = vmatprep.subr.mxu0 0.0
    %642 = vmatpush1.msra.mxu0 0.0
    %643 = vmatprep.subr.mxu0 0.0
    %644 = vmatpush1.msra.mxu0 0.0
    %645 = vmatprep.subr.mxu0 0.0
    %646 = vmatpush1.msra.mxu0 0.0
    %647 = vmatprep.subr.mxu0 0.0
    %648 = vmatpush1.msra.mxu0 0.0
    %649 = vmatprep.subr.mxu0 0.0
    %650 = vmatpush1.msra.mxu0 0.0
    %651 = vmatprep.subr.mxu0 0.0
    %652 = vmatpush1.msra.mxu0 0.0
    %653 = vmatprep.subr.mxu0 0.0
    %654 = vmatpush1.msra.mxu0 0.0
    %655 = vmatprep.subr.mxu0 0.0
    %656 = vmatpush1.msra.mxu0 0.0
    %657 = vmatprep.subr.mxu0 0.0
    %658 = vmatpush1.msra.mxu0 0.0
    %659 = vmatprep.subr.mxu0 0.0
    %660 = vmatpush1.msra.mxu0 0.0
    %661 = vmatprep.subr.mxu0 0.0
    %662 = vmatpush1.msra.mxu0 0.0
    %663 = vmatprep.subr.mxu0 0.0
    %664 = vmatpush1.msra.mxu0 0.0
    %665 = vmatprep.subr.mxu0 0.0
    %666 = vmatpush1.msra.mxu0 0.0
    %667 = vmatprep.mubr.f32.mxu0 0.0
    %668 = vmatmul.mubr.f32.gmra.mrb[0].mxu0 %v601
    %v669 = vpop.f32.mrb[0].mxu0
    %v670 = vadd.f32 0.0, %v669
    %v671 = vpop.f32.mrb[0].mxu0
    %672 = vdwg.mxu0
    %v673 = vsel %vm241, %v361, 0
    %675 = vmatprep.subr.mxu0 0.0
    %676 = vmatpush1.msra.mxu0 %v37
    %677 = vmatprep.subr.mxu0 0.0
    %678 = vmatpush1.msra.mxu0 0.0
    %679 = vmatprep.subr.mxu0 0.0
    %680 = vmatpush1.msra.mxu0 0.0
    %681 = vmatprep.subr.mxu0 0.0
    %682 = vmatpush1.msra.mxu0 0.0
    %683 = vmatprep.subr.mxu0 0.0
    %684 = vmatpush1.msra.mxu0 0.0
    %685 = vmatprep.subr.mxu0 0.0
    %686 = vmatpush1.msra.mxu0 0.0
    %687 = vmatprep.subr.mxu0 0.0
    %688 = vmatpush1.msra.mxu0 0.0
    %689 = vmatprep.subr.mxu0 0.0
    %690 = vmatpush1.msra.mxu0 0.0
    %691 = vmatprep.subr.mxu0 0.0
    %692 = vmatpush1.msra.mxu0 0.0
    %693 = vmatprep.subr.mxu0 0.0
    %694 = vmatpush1.msra.mxu0 0.0
    %695 = vmatprep.subr.mxu0 0.0
    %696 = vmatpush1.msra.mxu0 0.0
    %697 = vmatprep.subr.mxu0 0.0
    %698 = vmatpush1.msra.mxu0 0.0
    %699 = vmatprep.subr.mxu0 0.0
    %700 = vmatpush1.msra.mxu0 0.0
    %701 = vmatprep.subr.mxu0 0.0
    %702 = vmatpush1.msra.mxu0 0.0
    %703 = vmatprep.subr.mxu0 0.0
    %704 = vmatpush1.msra.mxu0 0.0
    %705 = vmatprep.subr.mxu0 0.0
    %706 = vmatpush1.msra.mxu0 0.0
    %707 = vmatprep.subr.mxu0 0.0
    %708 = vmatpush1.msra.mxu0 0.0
    %709 = vmatprep.subr.mxu0 0.0
    %710 = vmatpush1.msra.mxu0 0.0
    %711 = vmatprep.subr.mxu0 0.0
    %712 = vmatpush1.msra.mxu0 0.0
    %713 = vmatprep.subr.mxu0 0.0
    %714 = vmatpush1.msra.mxu0 0.0
    %715 = vmatprep.subr.mxu0 0.0
    %716 = vmatpush1.msra.mxu0 0.0
    %717 = vmatprep.subr.mxu0 0.0
    %718 = vmatpush1.msra.mxu0 0.0
    %719 = vmatprep.subr.mxu0 0.0
    %720 = vmatpush1.msra.mxu0 0.0
    %721 = vmatprep.subr.mxu0 0.0
    %722 = vmatpush1.msra.mxu0 0.0
    %723 = vmatprep.subr.mxu0 0.0
    %724 = vmatpush1.msra.mxu0 0.0
    %725 = vmatprep.subr.mxu0 0.0
    %726 = vmatpush1.msra.mxu0 0.0
    %727 = vmatprep.subr.mxu0 0.0
    %728 = vmatpush1.msra.mxu0 0.0
    %729 = vmatprep.subr.mxu0 0.0
    %730 = vmatpush1.msra.mxu0 0.0
    %731 = vmatprep.subr.mxu0 0.0
    %732 = vmatpush1.msra.mxu0 0.0
    %733 = vmatprep.subr.mxu0 0.0
    %734 = vmatpush1.msra.mxu0 0.0
    %735 = vmatprep.subr.mxu0 0.0
    %736 = vmatpush1.msra.mxu0 0.0
    %737 = vmatprep.subr.mxu0 0.0
    %738 = vmatpush1.msra.mxu0 0.0
    %739 = vmatprep.mubr.f32.mxu0 0.0
    %740 = vmatmul.mubr.f32.gmra.mrb[0].mxu0 %v673
    %v741 = vpop.f32.mrb[0].mxu0
    %v742 = vadd.f32 0.0, %v741
    %v743 = vpop.f32.mrb[0].mxu0
    %744 = vdwg.mxu0
    %v745 = vsel %vm241, %v365, 0
    %747 = vmatprep.subr.mxu0 0.0
    %748 = vmatpush1.msra.mxu0 %v38
    %749 = vmatprep.subr.mxu0 0.0
    %750 = vmatpush1.msra.mxu0 0.0
    %751 = vmatprep.subr.mxu0 0.0
    %752 = vmatpush1.msra.mxu0 0.0
    %753 = vmatprep.subr.mxu0 0.0
    %754 = vmatpush1.msra.mxu0 0.0
    %755 = vmatprep.subr.mxu0 0.0
    %756 = vmatpush1.msra.mxu0 0.0
    %757 = vmatprep.subr.mxu0 0.0
    %758 = vmatpush1.msra.mxu0 0.0
    %759 = vmatprep.subr.mxu0 0.0
    %760 = vmatpush1.msra.mxu0 0.0
    %761 = vmatprep.subr.mxu0 0.0
    %762 = vmatpush1.msra.mxu0 0.0
    %763 = vmatprep.subr.mxu0 0.0
    %764 = vmatpush1.msra.mxu0 0.0
    %765 = vmatprep.subr.mxu0 0.0
    %766 = vmatpush1.msra.mxu0 0.0
    %767 = vmatprep.subr.mxu0 0.0
    %768 = vmatpush1.msra.mxu0 0.0
    %769 = vmatprep.subr.mxu0 0.0
    %770 = vmatpush1.msra.mxu0 0.0
    %771 = vmatprep.subr.mxu0 0.0
    %772 = vmatpush1.msra.mxu0 0.0
    %773 = vmatprep.subr.mxu0 0.0
    %774 = vmatpush1.msra.mxu0 0.0
    %775 = vmatprep.subr.mxu0 0.0
    %776 = vmatpush1.msra.mxu0 0.0
    %777 = vmatprep.subr.mxu0 0.0
    %778 = vmatpush1.msra.mxu0 0.0
    %779 = vmatprep.subr.mxu0 0.0
    %780 = vmatpush1.msra.mxu0 0.0
    %781 = vmatprep.subr.mxu0 0.0
    %782 = vmatpush1.msra.mxu0 0.0
    %783 = vmatprep.subr.mxu0 0.0
    %784 = vmatpush1.msra.mxu0 0.0
    %785 = vmatprep.subr.mxu0 0.0
    %786 = vmatpush1.msra.mxu0 0.0
    %787 = vmatprep.subr.mxu0 0.0
    %788 = vmatpush1.msra.mxu0 0.0
    %789 = vmatprep.subr.mxu0 0.0
    %790 = vmatpush1.msra.mxu0 0.0
    %791 = vmatprep.subr.mxu0 0.0
    %792 = vmatpush1.msra.mxu0 0.0
    %793 = vmatprep.subr.mxu0 0.0
    %794 = vmatpush1.msra.mxu0 0.0
    %795 = vmatprep.subr.mxu0 0.0
    %796 = vmatpush1.msra.mxu0 0.0
    %797 = vmatprep.subr.mxu0 0.0
    %798 = vmatpush1.msra.mxu0 0.0
    %799 = vmatprep.subr.mxu0 0.0
    %800 = vmatpush1.msra.mxu0 0.0
    %801 = vmatprep.subr.mxu0 0.0
    %802 = vmatpush1.msra.mxu0 0.0
    %803 = vmatprep.subr.mxu0 0.0
    %804 = vmatpush1.msra.mxu0 0.0
    %805 = vmatprep.subr.mxu0 0.0
    %806 = vmatpush1.msra.mxu0 0.0
    %807 = vmatprep.subr.mxu0 0.0
    %808 = vmatpush1.msra.mxu0 0.0
    %809 = vmatprep.subr.mxu0 0.0
    %810 = vmatpush1.msra.mxu0 0.0
    %811 = vmatprep.mubr.f32.mxu0 0.0
    %812 = vmatmul.mubr.f32.gmra.mrb[0].mxu0 %v745
    %v813 = vpop.f32.mrb[0].mxu0
    %v814 = vadd.f32 0.0, %v813
    %v815 = vpop.f32.mrb[0].mxu0
    %816 = vdwg.mxu0
    %v817 = vsel %vm241, %v369, 0
    %819 = vmatprep.subr.mxu0 0.0
    %820 = vmatpush1.msra.mxu0 %v39
    %821 = vmatprep.subr.mxu0 0.0
    %822 = vmatpush1.msra.mxu0 0.0
    %823 = vmatprep.subr.mxu0 0.0
    %824 = vmatpush1.msra.mxu0 0.0
    %825 = vmatprep.subr.mxu0 0.0
    %826 = vmatpush1.msra.mxu0 0.0
    %827 = vmatprep.subr.mxu0 0.0
    %828 = vmatpush1.msra.mxu0 0.0
    %829 = vmatprep.subr.mxu0 0.0
    %830 = vmatpush1.msra.mxu0 0.0
    %831 = vmatprep.subr.mxu0 0.0
    %832 = vmatpush1.msra.mxu0 0.0
    %833 = vmatprep.subr.mxu0 0.0
    %834 = vmatpush1.msra.mxu0 0.0
    %835 = vmatprep.subr.mxu0 0.0
    %836 = vmatpush1.msra.mxu0 0.0
    %837 = vmatprep.subr.mxu0 0.0
    %838 = vmatpush1.msra.mxu0 0.0
    %839 = vmatprep.subr.mxu0 0.0
    %840 = vmatpush1.msra.mxu0 0.0
    %841 = vmatprep.subr.mxu0 0.0
    %842 = vmatpush1.msra.mxu0 0.0
    %843 = vmatprep.subr.mxu0 0.0
    %844 = vmatpush1.msra.mxu0 0.0
    %845 = vmatprep.subr.mxu0 0.0
    %846 = vmatpush1.msra.mxu0 0.0
    %847 = vmatprep.subr.mxu0 0.0
    %848 = vmatpush1.msra.mxu0 0.0
    %849 = vmatprep.subr.mxu0 0.0
    %850 = vmatpush1.msra.mxu0 0.0
    %851 = vmatprep.subr.mxu0 0.0
    %852 = vmatpush1.msra.mxu0 0.0
    %853 = vmatprep.subr.mxu0 0.0
    %854 = vmatpush1.msra.mxu0 0.0
    %855 = vmatprep.subr.mxu0 0.0
    %856 = vmatpush1.msra.mxu0 0.0
    %857 = vmatprep.subr.mxu0 0.0
    %858 = vmatpush1.msra.mxu0 0.0
    %859 = vmatprep.subr.mxu0 0.0
    %860 = vmatpush1.msra.mxu0 0.0
    %861 = vmatprep.subr.mxu0 0.0
    %862 = vmatpush1.msra.mxu0 0.0
    %863 = vmatprep.subr.mxu0 0.0
    %864 = vmatpush1.msra.mxu0 0.0
    %865 = vmatprep.subr.mxu0 0.0
    %866 = vmatpush1.msra.mxu0 0.0
    %867 = vmatprep.subr.mxu0 0.0
    %868 = vmatpush1.msra.mxu0 0.0
    %869 = vmatprep.subr.mxu0 0.0
    %870 = vmatpush1.msra.mxu0 0.0
    %871 = vmatprep.subr.mxu0 0.0
    %872 = vmatpush1.msra.mxu0 0.0
    %873 = vmatprep.subr.mxu0 0.0
    %874 = vmatpush1.msra.mxu0 0.0
    %875 = vmatprep.subr.mxu0 0.0
    %876 = vmatpush1.msra.mxu0 0.0
    %877 = vmatprep.subr.mxu0 0.0
    %878 = vmatpush1.msra.mxu0 0.0
    %879 = vmatprep.subr.mxu0 0.0
    %880 = vmatpush1.msra.mxu0 0.0
    %881 = vmatprep.subr.mxu0 0.0
    %882 = vmatpush1.msra.mxu0 0.0
    %883 = vmatprep.mubr.f32.mxu0 0.0
    %884 = vmatmul.mubr.f32.gmra.mrb[0].mxu0 %v817
    %v885 = vpop.f32.mrb[0].mxu0
    %v886 = vadd.f32 0.0, %v885
    %v887 = vpop.f32.mrb[0].mxu0
    %888 = vdwg.mxu0
    %v889 = vsel %vm241, %v373, 0
    %891 = vmatprep.subr.mxu0 0.0
    %892 = vmatpush1.msra.mxu0 %v40
    %893 = vmatprep.subr.mxu0 0.0
    %894 = vmatpush1.msra.mxu0 0.0
    %895 = vmatprep.subr.mxu0 0.0
    %896 = vmatpush1.msra.mxu0 0.0
    %897 = vmatprep.subr.mxu0 0.0
    %898 = vmatpush1.msra.mxu0 0.0
    %899 = vmatprep.subr.mxu0 0.0
    %900 = vmatpush1.msra.mxu0 0.0
    %901 = vmatprep.subr.mxu0 0.0
    %902 = vmatpush1.msra.mxu0 0.0
    %903 = vmatprep.subr.mxu0 0.0
    %904 = vmatpush1.msra.mxu0 0.0
    %905 = vmatprep.subr.mxu0 0.0
    %906 = vmatpush1.msra.mxu0 0.0
    %907 = vmatprep.subr.mxu0 0.0
    %908 = vmatpush1.msra.mxu0 0.0
    %909 = vmatprep.subr.mxu0 0.0
    %910 = vmatpush1.msra.mxu0 0.0
    %911 = vmatprep.subr.mxu0 0.0
    %912 = vmatpush1.msra.mxu0 0.0
    %913 = vmatprep.subr.mxu0 0.0
    %914 = vmatpush1.msra.mxu0 0.0
    %915 = vmatprep.subr.mxu0 0.0
    %916 = vmatpush1.msra.mxu0 0.0
    %917 = vmatprep.subr.mxu0 0.0
    %918 = vmatpush1.msra.mxu0 0.0
    %919 = vmatprep.subr.mxu0 0.0
    %920 = vmatpush1.msra.mxu0 0.0
    %921 = vmatprep.subr.mxu0 0.0
    %922 = vmatpush1.msra.mxu0 0.0
    %923 = vmatprep.subr.mxu0 0.0
    %924 = vmatpush1.msra.mxu0 0.0
    %925 = vmatprep.subr.mxu0 0.0
    %926 = vmatpush1.msra.mxu0 0.0
    %927 = vmatprep.subr.mxu0 0.0
    %928 = vmatpush1.msra.mxu0 0.0
    %929 = vmatprep.subr.mxu0 0.0
    %930 = vmatpush1.msra.mxu0 0.0
    %931 = vmatprep.subr.mxu0 0.0
    %932 = vmatpush1.msra.mxu0 0.0
    %933 = vmatprep.subr.mxu0 0.0
    %934 = vmatpush1.msra.mxu0 0.0
    %935 = vmatprep.subr.mxu0 0.0
    %936 = vmatpush1.msra.mxu0 0.0
    %937 = vmatprep.subr.mxu0 0.0
    %938 = vmatpush1.msra.mxu0 0.0
    %939 = vmatprep.subr.mxu0 0.0
    %940 = vmatpush1.msra.mxu0 0.0
    %941 = vmatprep.subr.mxu0 0.0
    %942 = vmatpush1.msra.mxu0 0.0
    %943 = vmatprep.subr.mxu0 0.0
    %944 = vmatpush1.msra.mxu0 0.0
    %945 = vmatprep.subr.mxu0 0.0
    %946 = vmatpush1.msra.mxu0 0.0
    %947 = vmatprep.subr.mxu0 0.0
    %948 = vmatpush1.msra.mxu0 0.0
    %949 = vmatprep.subr.mxu0 0.0
    %950 = vmatpush1.msra.mxu0 0.0
    %951 = vmatprep.subr.mxu0 0.0
    %952 = vmatpush1.msra.mxu0 0.0
    %953 = vmatprep.subr.mxu0 0.0
    %954 = vmatpush1.msra.mxu0 0.0
    %955 = vmatprep.mubr.f32.mxu0 0.0
    %956 = vmatmul.mubr.f32.gmra.mrb[0].mxu0 %v889
    %v957 = vpop.f32.mrb[0].mxu0
    %v958 = vadd.f32 0.0, %v957
    %v959 = vpop.f32.mrb[0].mxu0
    %960 = vdwg.mxu0
    %v961 = vrcp.pop %v384
    %v963 = vrot.slane %v961, 1
    %v964 = vrot.slane %v961, 2
    %v965 = vrot.slane %v961, 3
    %v966 = vrot.slane %v961, 4
    %v967 = vrot.slane %v961, 5
    %v968 = vrot.slane %v961, 6
    %v969 = vrot.slane %v961, 7
    %v978 = vmul.f32 %v454, %v961
    %v979 = vmul.f32 %v526, %v963
    %v980 = vmul.f32 %v598, %v964
    %v981 = vmul.f32 %v670, %v965
    %v982 = vmul.f32 %v742, %v966
    %v983 = vmul.f32 %v814, %v967
    %v984 = vmul.f32 %v886, %v968
    %v985 = vmul.f32 %v958, %v969
    %v994 = vrot.slane %v979, 7
    %v995 = vsel %vm226, %v994, %v978
    %v996 = vrot.slane %v980, 6
    %v997 = vsel %vm228, %v996, %v995
    %v998 = vrot.slane %v981, 5
    %v999 = vsel %vm230, %v998, %v997
    %v1000 = vrot.slane %v982, 4
    %v1001 = vsel %vm232, %v1000, %v999
    %v1002 = vrot.slane %v983, 3
    %v1003 = vsel %vm234, %v1002, %v1001
    %v1004 = vrot.slane %v984, 2
    %v1005 = vsel %vm236, %v1004, %v1003
    %v1006 = vrot.slane %v985, 1
    %v1007 = vsel %vm238, %v1006, %v1005
    %1009 = vst.msk [vmem:[#allocation5] sm:$0xff] %vm58, %v1007
    // Predicated region
    $region22: #{tpu_custom_call.1} parent=1 // pred_check
      _
    $region23: #{tpu_custom_call.1} parent=1 // pred_check_branch
      %1011 = sbr.rel (0) target = $region25
    $region24: #{tpu_custom_call.1} parent=1 // pred_region
      %s1013 = ssub.s32 128, 128
      %1014 = vsyncadd [#allocation4], %s1013
      %s1016 = sshll.u32 [#allocation5], 4
      %s1017 = int_to_ptr.vmem [resolvable:$true] %s1016
      %1019 = dma.vmem_to_hbm [thread:$0]  %s1017, 128, %s4, [#allocation4]
    $region25: #{tpu_custom_call.1} parent=1 // pred_fallthru
      _
    // Predicated region
    $region26: #{tpu_custom_call.1} parent=1 // pred_check
      _
    $region27: #{tpu_custom_call.1} parent=1 // pred_check_branch
      %1021 = sbr.rel (0) target = $region29
    $region28: #{tpu_custom_call.1} parent=1 // pred_region
      %1022 = dma.done [#allocation4], 128
    $region29: #{tpu_custom_call.1} parent=1 // pred_fallthru
      _
    %1023 = vsyncpa [#allocation3], 1
    %1024 = vsyncpa [#allocation4], 1

</llo_original>
